<compile_context>
chip_gen: v5e
topology: v5e:2x2
jax: 0.10.0
libtpu: 0.0.40
codegen_flags: <defaults>
</compile_context>

<pallas_src>
import math
from functools import partial

import jax
import jax.numpy as jnp
import numpy as np
from jax.experimental import pallas as pl
from jax.experimental.pallas import tpu as pltpu

_LANE = 128
_VMEM_LIMIT_BYTES = 48 * 1024 * 1024   # safe on v7x (64 MiB physical), v5e/v6e (128 MiB)
_RESIDENT_B_BYTES = 10 * 1024 * 1024   # cap for keeping the small matmul operand VMEM-resident
_RESIDENT_W_BYTES = 8 * 1024 * 1024    # cap for the fused-epilogue W_aug
_TM_CAP = 512                          # row tile of the adj matmul
_TK_CAP = 1024                         # reduction tile of the adj matmul


def _round_up(x, m):
    return ((x + m - 1) // m) * m


def _pick_tile(total, cap):
    """Largest multiple of 128 that divides `total` and is <= cap (>= 128)."""
    if total <= _LANE:
        return total
    best = _LANE
    for t in range(_LANE, min(total, cap) + 1, _LANE):
        if total % t == 0:
            best = t
    return best


def _pad_cast(a, shape, dtype):
    """Zero-pad `a` to `shape` and cast to `dtype` in a single fused pass."""
    if a.shape == tuple(shape):
        return a.astype(dtype)
    out = jnp.zeros(shape, dtype)
    return out.at[tuple(slice(0, s) for s in a.shape)].set(a.astype(dtype))


def _make_x_aug(x, n_p, fi_p, dtype):
    """x_aug = [x | 1], zero-padded to (n_p, fi_p)."""
    n, f_in = x.shape
    xa = jnp.zeros((n_p, fi_p), dtype)
    xa = xa.at[:n, :f_in].set(x.astype(dtype))
    return xa.at[:n, f_in].set(jnp.ones((n,), dtype))


def _make_w_aug(w, b, fi_p, fo_p, dtype):
    """W_aug = [[W^T]; [b]], zero-padded to (fi_p, fo_p)."""
    f_out, f_in = w.shape
    wa = jnp.zeros((fi_p, fo_p), dtype)
    wa = wa.at[:f_in, :f_out].set(w.T.astype(dtype))
    if b is not None:
        wa = wa.at[f_in, :f_out].set(b.astype(dtype))
    return wa


# --------------------------------------------------------------------------
# Small matmul: support = x_aug @ W_aug  (only used when F_out is the narrower
# side).  W_aug stays VMEM-resident (constant block index).
# --------------------------------------------------------------------------
def _linear_kernel(x_ref, w_ref, o_ref):
    o_ref[...] = jnp.dot(x_ref[...], w_ref[...],
                         preferred_element_type=jnp.float32).astype(o_ref.dtype)


def _linear(x_aug, w_aug, *, out_dtype):
    n_p, fi_p = x_aug.shape
    fo_p = w_aug.shape[1]
    tm = _pick_tile(n_p, _TM_CAP)
    return pl.pallas_call(
        _linear_kernel,
        out_shape=jax.ShapeDtypeStruct((n_p, fo_p), out_dtype),
        grid=(n_p // tm,),
        in_specs=[pl.BlockSpec((tm, fi_p), lambda i: (i, 0)),
                  pl.BlockSpec((fi_p, fo_p), lambda i: (0, 0))],
        out_specs=pl.BlockSpec((tm, fo_p), lambda i: (i, 0)),
        compiler_params=pltpu.CompilerParams(
            dimension_semantics=("parallel",),
            vmem_limit_bytes=_VMEM_LIMIT_BYTES),
    )(x_aug, w_aug)


# --------------------------------------------------------------------------
# Dominant matmul: out = adj @ B   (optionally  (adj @ B) @ W_aug in the
# finalize epilogue).  Grid = (row tiles, reduction tiles over N).
# --------------------------------------------------------------------------
def _make_adj_kernel(*, tk, b_resident, fuse_w, use_scratch):
    def kernel(*refs):
        if fuse_w:
            adj_ref, b_ref, w_ref, o_ref, acc_ref = refs
        elif use_scratch:
            adj_ref, b_ref, o_ref, acc_ref = refs
        else:
            adj_ref, b_ref, o_ref = refs
            acc_ref = o_ref            # accumulate directly into the f32 output tile

        kk = pl.program_id(1)

        @pl.when(kk == 0)
        def _init():
            acc_ref[...] = jnp.zeros_like(acc_ref)

        if b_resident:
            # B is the full (n_p, width) array, VMEM-resident; slice this
            # reduction step's rows.  tk is always a multiple of 128.
            start = pl.multiple_of(kk * tk, 128)
            b_tile = b_ref[pl.ds(start, tk), :]
        else:
            b_tile = b_ref[...]

        acc_ref[...] += jnp.dot(adj_ref[...], b_tile,
                                preferred_element_type=jnp.float32)

        if fuse_w or use_scratch:
            @pl.when(kk == pl.num_programs(1) - 1)
            def _finalize():
                if fuse_w:
                    # Fused epilogue: o = (adj @ x_aug) @ W_aug, f32 all the way.
                    o_ref[...] = jnp.dot(
                        acc_ref[...], w_ref[...],
                        preferred_element_type=jnp.float32).astype(o_ref.dtype)
                else:
                    o_ref[...] = acc_ref[...].astype(o_ref.dtype)

    return kernel


def _adj_matmul(adj_p, b_mat, *, w_aug, tm, tk, out_dtype):
    n_p = adj_p.shape[0]
    width = b_mat.shape[1]
    assert b_mat.shape[0] == n_p and n_p % tm == 0 and n_p % tk == 0

    fuse_w = w_aug is not None
    fo = w_aug.shape[1] if fuse_w else width
    use_scratch = fuse_w or (np.dtype(out_dtype) != np.dtype(np.float32))
    b_resident = (n_p * width * b_mat.dtype.itemsize) <= _RESIDENT_B_BYTES

    in_specs = [pl.BlockSpec((tm, tk), lambda i, kk: (i, kk))]
    operands = [adj_p, b_mat]
    if b_resident:
        # Constant block index => fetched once, stays VMEM-resident; no
        # per-row-tile re-streaming of the small operand.
        in_specs.append(pl.BlockSpec((n_p, width), lambda i, kk: (0, 0)))
    else:
        in_specs.append(pl.BlockSpec((tk, width), lambda i, kk: (kk, 0)))
    if fuse_w:
        in_specs.append(pl.BlockSpec((w_aug.shape[0], fo), lambda i, kk: (0, 0)))
        operands.append(w_aug)

    scratch_shapes = [pltpu.VMEM((tm, width), jnp.float32)] if use_scratch else []

    return pl.pallas_call(
        _make_adj_kernel(tk=tk, b_resident=b_resident,
                         fuse_w=fuse_w, use_scratch=use_scratch),
        out_shape=jax.ShapeDtypeStruct((n_p, fo), out_dtype),
        grid=(n_p // tm, n_p // tk),
        in_specs=in_specs,
        out_specs=pl.BlockSpec((tm, fo), lambda i, kk: (i, 0)),
        scratch_shapes=scratch_shapes,
        compiler_params=pltpu.CompilerParams(
            dimension_semantics=("parallel", "arbitrary"),
            vmem_limit_bytes=_VMEM_LIMIT_BYTES),
    )(*operands)


@partial(jax.jit, static_argnames=("bf16_operands",))
def graph_convolution(x, adj, w, b, *, bf16_operands=True):
    """GCN forward: adj @ (x @ w.T + b).

    x: (N, F_in), adj: (N, N) dense, w: (F_out, F_in) (nn.Linear layout),
    b: (F_out,) or None.  Returns (N, F_out) in x.dtype.
    bf16_operands=True (default) feeds the MXU bf16 operands with f32
    accumulation; False keeps every operand f32 (exact path).
    """
    n, f_in = x.shape
    f_out, f_in2 = w.shape
    assert f_in == f_in2 and adj.shape == (n, n)
    out_dtype = x.dtype
    op_dtype = jnp.bfloat16 if bf16_operands else x.dtype

    # Padded, lane-dense shapes.  The +1 input feature is the bias "ones" column.
    n_p = _round_up(n, _LANE)
    fi_p = _round_up(f_in + 1, _LANE)
    fo_p = _round_up(f_out, _LANE)

    # Row tile: as large as possible (<=512) but keep >=2 row tiles so both v7x
    # TensorCores get work on the "parallel" axis.  Reduction tile <=1024.
    tm = _pick_tile(n_p, _TM_CAP)
    while n_p // tm < 2 and tm > _LANE:
        tm //= 2
    tk = _pick_tile(n_p, _TK_CAP)

    # adj is the dominant HBM traffic: pad + bf16 cast in one fused pass (and
    # no pad at all when N is already lane-aligned).
    # TODO(synk): torch.spmm's sparse adjacency has no Pallas sparse
    # equivalent; adj is handled as a dense (N, N) matrix.
    adj_p = _pad_cast(adj, (n_p, n_p), op_dtype)

    # Contract the O(N^2) matmul over the narrower feature side.  When F_in is
    # the narrower (or equal) side, fuse the W_aug matmul into the adj kernel's
    # epilogue so the intermediate never round-trips HBM.
    # TODO(synk): feature dims are assumed to fit VMEM-resident (typical GCN
    # widths); very wide layers would additionally need feature-dim tiling.
    fuse_w = (fi_p <= fo_p) and (fi_p * fo_p * 4 <= _RESIDENT_W_BYTES)

    if fuse_w:
        x_aug = _make_x_aug(x, n_p, fi_p, op_dtype)
        w_aug = _make_w_aug(w, b, fi_p, fo_p, jnp.float32)   # f32 epilogue operand
        out_p = _adj_matmul(adj_p, x_aug, w_aug=w_aug, tm=tm, tk=tk,
                            out_dtype=out_dtype)
    else:
        x_aug = _make_x_aug(x, n_p, fi_p, jnp.float32)
        w_aug = _make_w_aug(w, b, fi_p, fo_p, jnp.float32)
        support = _linear(x_aug, w_aug, out_dtype=op_dtype)   # (n_p, fo_p)
        out_p = _adj_matmul(adj_p, support, w_aug=None, tm=tm, tk=tk,
                            out_dtype=out_dtype)
    return out_p[:n, :f_out]


def _check(key, n, f_in, f_out, *, bf16_operands, rtol, atol):
    k_x, k_adj, k_w, k_b = jax.random.split(key, 4)

    # Parameter init mirroring the PyTorch module: U(-stdv, stdv), stdv = 1/sqrt(F_in).
    stdv = 1.0 / math.sqrt(f_in)
    w = jax.random.uniform(k_w, (f_out, f_in), jnp.float32, -stdv, stdv)
    b = jax.random.uniform(k_b, (f_out,), jnp.float32, -stdv, stdv)

    x = jax.random.normal(k_x, (n, f_in), jnp.float32)
    # Dense symmetric adjacency with self-loops, row-normalized.
    a = (jax.random.uniform(k_adj, (n, n)) > 0.7).astype(jnp.float32)
    a = jnp.maximum(a, a.T) + jnp.eye(n, dtype=jnp.float32)
    adj = a / jnp.sum(a, axis=1, keepdims=True)

    out = jax.block_until_ready(
        graph_convolution(x, adj, w, b, bf16_operands=bf16_operands))
    assert out.shape == (n, f_out)

    # float64 host reference with module semantics: adj @ (x @ W^T + b).
    x64, adj64, w64, b64 = (np.asarray(v, np.float64) for v in (x, adj, w, b))
    ref = adj64 @ (x64 @ w64.T + b64)
    np.testing.assert_allclose(np.asarray(out, np.float64), ref,
                               rtol=rtol, atol=atol)


if __name__ == "__main__":
    key = jax.random.PRNGKey(0)
    k1, k2, k3, k4 = jax.random.split(key, 4)
    # Fused-epilogue path, single-tile grid, exact all-f32 route (tight check).
    _check(k1, n=16, f_in=8, f_out=32, bf16_operands=False, rtol=1e-3, atol=1e-3)
    # Fused-epilogue path, default bf16 operands, multi-tile grid (row-parallel
    # axis + 2-step reduction with pl.when init/finalize), VMEM-resident x_aug.
    _check(k2, n=1200, f_in=8, f_out=256, bf16_operands=True, rtol=5e-2, atol=5e-2)
    # Support path (F_in side wider): small linear kernel + adj matmul with the
    # bf16 support VMEM-resident and direct accumulation into the f32 output.
    _check(k3, n=1200, f_in=200, f_out=48, bf16_operands=True, rtol=5e-2, atol=5e-2)
    # Support path with ragged N (padding) on the exact f32 route.
    _check(k4, n=300, f_in=200, f_out=48, bf16_operands=False, rtol=1e-3, atol=1e-3)
    print("KERNEL_OK")
</pallas_src>

<mosaic_0001>
module attributes {stable_mosaic.version = 11 : i64} {
  func.func @kernel(%arg0: i32, %arg1: i32, %arg2: memref<128x128xf32, #tpu.memory_space<vmem>>, %arg3: memref<128x128xf32, #tpu.memory_space<vmem>>, %arg4: memref<128x128xf32, #tpu.memory_space<vmem>>, %arg5: memref<128x128xf32, #tpu.memory_space<vmem>>, %arg6: memref<128x128xf32, #tpu.memory_space<vmem>>) attributes {dimension_semantics = [#tpu.dimension_semantics<parallel>, #tpu.dimension_semantics<arbitrary>], iteration_bounds = array<i64: 1, 1>, scalar_prefetch = 0 : i64, scratch_operands = 1 : i64, tpu.core_type = #tpu.core_type<tc>, window_params = [{transform_indices = @transform_0, window_bounds = array<i64: 128, 128>}, {pipeline_mode = #tpu.pipeline_mode<synchronous>, transform_indices = @transform_1, window_bounds = array<i64: 128, 128>}, {pipeline_mode = #tpu.pipeline_mode<synchronous>, transform_indices = @transform_2, window_bounds = array<i64: 128, 128>}, {transform_indices = @transform_3, window_bounds = array<i64: 128, 128>}]} {
    %c0_i32 = arith.constant 0 : i32
    %0 = arith.cmpi eq, %arg1, %c0_i32 : i32
    %1 = arith.extui %0 : i1 to i32
    %c0_i32_0 = arith.constant 0 : i32
    %2 = arith.cmpi ne, %1, %c0_i32_0 : i32
    scf.if %2 {
      %cst_9 = arith.constant 0.000000e+00 : f32
      %15 = vector.broadcast %cst_9 : f32 to vector<128x128xf32>
      %c0_10 = arith.constant 0 : index
      %c0_11 = arith.constant 0 : index
      %16 = vector.load %arg6[%c0_10, %c0_11] : memref<128x128xf32, #tpu.memory_space<vmem>>, vector<128x128xf32>
      tpu.vector_store %arg6[%c0_10, %c0_11], %15 {strides = array<i32>} : memref<128x128xf32, #tpu.memory_space<vmem>>, vector<128x128xf32>,
    } else {
    }
    %c128_i32 = arith.constant 128 : i32
    %3 = arith.muli %arg1, %c128_i32 : i32
    %4 = tpu.assume_multiple %3, 128 : i32
    %5 = arith.index_cast %4 : i32 to index
    %c0 = arith.constant 0 : index
    %6 = vector.load %arg3[%5, %c0] : memref<128x128xf32, #tpu.memory_space<vmem>>, vector<128x128xf32>
    %c0_1 = arith.constant 0 : index
    %c0_2 = arith.constant 0 : index
    %7 = vector.load %arg6[%c0_1, %c0_2] : memref<128x128xf32, #tpu.memory_space<vmem>>, vector<128x128xf32>
    %c0_3 = arith.constant 0 : index
    %c0_4 = arith.constant 0 : index
    %8 = vector.load %arg2[%c0_3, %c0_4] : memref<128x128xf32, #tpu.memory_space<vmem>>, vector<128x128xf32>
    %cst = arith.constant dense<0.000000e+00> : vector<128x128xf32>
    %9 = tpu.matmul %8, %6, %cst {dimension_numbers = #tpu.dot_dimension_numbers<[1], [0], [0], [1], [0, 0, 1, 1], [], []>} : vector<128x128xf32>, vector<128x128xf32>, vector<128x128xf32> -> vector<128x128xf32>
    %10 = arith.addf %7, %9 : vector<128x128xf32>
    %c0_5 = arith.constant 0 : index
    %c0_6 = arith.constant 0 : index
    %11 = vector.load %arg6[%c0_5, %c0_6] : memref<128x128xf32, #tpu.memory_space<vmem>>, vector<128x128xf32>
    tpu.vector_store %arg6[%c0_5, %c0_6], %10 {strides = array<i32>} : memref<128x128xf32, #tpu.memory_space<vmem>>, vector<128x128xf32>,
    %c0_i32_7 = arith.constant 0 : i32
    %12 = arith.cmpi eq, %arg1, %c0_i32_7 : i32
    %13 = arith.extui %12 : i1 to i32
    %c0_i32_8 = arith.constant 0 : i32
    %14 = arith.cmpi ne, %13, %c0_i32_8 : i32
    scf.if %14 {
      %c0_9 = arith.constant 0 : index
      %c0_10 = arith.constant 0 : index
      %15 = vector.load %arg6[%c0_9, %c0_10] : memref<128x128xf32, #tpu.memory_space<vmem>>, vector<128x128xf32>
      %c0_11 = arith.constant 0 : index
      %c0_12 = arith.constant 0 : index
      %16 = vector.load %arg4[%c0_11, %c0_12] : memref<128x128xf32, #tpu.memory_space<vmem>>, vector<128x128xf32>
      %cst_13 = arith.constant dense<0.000000e+00> : vector<128x128xf32>
      %17 = tpu.matmul %15, %16, %cst_13 {dimension_numbers = #tpu.dot_dimension_numbers<[1], [0], [0], [1], [0, 0, 1, 1], [], []>} : vector<128x128xf32>, vector<128x128xf32>, vector<128x128xf32> -> vector<128x128xf32>
      %c0_14 = arith.constant 0 : index
      %c0_15 = arith.constant 0 : index
      %18 = vector.load %arg5[%c0_14, %c0_15] : memref<128x128xf32, #tpu.memory_space<vmem>>, vector<128x128xf32>
      tpu.vector_store %arg5[%c0_14, %c0_15], %17 {strides = array<i32>} : memref<128x128xf32, #tpu.memory_space<vmem>>, vector<128x128xf32>,
    } else {
    }
    return
  }
  func.func @transform_0(%arg0: i32, %arg1: i32) -> (i32, i32) {
    %c0_i32 = arith.constant 0 : i32
    return %arg0, %arg1 : i32, i32
  }
  func.func @transform_1(%arg0: i32, %arg1: i32) -> (i32, i32) {
    %c0_i32 = arith.constant 0 : i32
    %c0_i32_0 = arith.constant 0 : i32
    %c0_i32_1 = arith.constant 0 : i32
    return %c0_i32, %c0_i32_0 : i32, i32
  }
  func.func @transform_2(%arg0: i32, %arg1: i32) -> (i32, i32) {
    %c0_i32 = arith.constant 0 : i32
    %c0_i32_0 = arith.constant 0 : i32
    %c0_i32_1 = arith.constant 0 : i32
    return %c0_i32, %c0_i32_0 : i32, i32
  }
  func.func @transform_3(%arg0: i32, %arg1: i32) -> (i32, i32) {
    %c0_i32 = arith.constant 0 : i32
    %c0_i32_0 = arith.constant 0 : i32
    return %arg0, %c0_i32 : i32, i32
  }
}

</mosaic_0001>

<llo_original>
// kernel: graph_convolution.1
$region0: #{graph_convolution.1}
  #allocation0 [shape = 'u32[]', space=smem, size = 0x4, offset = 0x4, fixed_abs, tag = 'smem constant byte address 0x4 - core index']
  #allocation1 [shape = 'u32[72,128]{1,0:T(1,128)}', space=vmem, size = 0x9000, scoped, tag = 'internal scratch']
  #allocation2 [shape = 'f32[128,128]{1,0:T(8,128)}', space=vmem, size = 0x10000, scoped, tag = 'scratch operand']
  %s0 = inlined_call_operand.vmem [shape: f32[128,128], index: 0, kind: input, shape index: {}]
  %s1 = inlined_call_operand.vmem [shape: f32[128,128], index: 1, kind: input, shape index: {}]
  %s2 = inlined_call_operand.vmem [shape: f32[128,128], index: 2, kind: input, shape index: {}]
  %s3 = inlined_call_operand.vmem [shape: f32[128,128], index: 3, kind: output, shape index: {}]
  %s4 = sld [smem:[#allocation0]]
  $region30: #{graph_convolution.1} parent=0
    _
  %s6 = ssub.s32 1, %s4
  %s7 = scalar_select 0, %s6, %s4
  // Predicated region
  $region2: #{graph_convolution.1} parent=0 // pred_check
    _
  $region3: #{graph_convolution.1} parent=0 // pred_check_branch
    %9 = sbr.rel (0) target = $region5
  $region4: #{graph_convolution.1} parent=0 // pred_region
    _
  $region5: #{graph_convolution.1} parent=0 // pred_fallthru
    _
  // Predicated region
  $region6: #{graph_convolution.1} parent=0 // pred_check
    _
  $region7: #{graph_convolution.1} parent=0 // pred_check_branch
    %11 = sbr.rel (0) target = $region9
  $region8: #{graph_convolution.1} parent=0 // pred_region
    _
  $region9: #{graph_convolution.1} parent=0 // pred_fallthru
    _
  // Predicated region
  $region10: #{graph_convolution.1} parent=0 // pred_check
    _
  $region11: #{graph_convolution.1} parent=0 // pred_check_branch
    %13 = sbr.rel (0) target = $region13
  $region12: #{graph_convolution.1} parent=0 // pred_region
    _
  $region13: #{graph_convolution.1} parent=0 // pred_fallthru
    _
  %p14 = scmp.eq.s32.totalorder 0, 0
  // Predicated region
  $region14: #{graph_convolution.1} parent=0 // pred_check
    %p15 = pneg %p14
  $region15: #{graph_convolution.1} parent=0 // pred_check_branch
    %17 = sbr.rel (%p15) target = $region17
  $region16: #{graph_convolution.1} parent=0 // pred_region
    %18 = vst [vmem:[#allocation2] sm:$0xff] 0.0
    %19 = vst [vmem:[#allocation2 + $0x8] sm:$0xff] 0.0
    %20 = vst [vmem:[#allocation2 + $0x10] sm:$0xff] 0.0
    %21 = vst [vmem:[#allocation2 + $0x18] sm:$0xff] 0.0
    %22 = vst [vmem:[#allocation2 + $0x20] sm:$0xff] 0.0
    %23 = vst [vmem:[#allocation2 + $0x28] sm:$0xff] 0.0
    %24 = vst [vmem:[#allocation2 + $0x30] sm:$0xff] 0.0
    %25 = vst [vmem:[#allocation2 + $0x38] sm:$0xff] 0.0
    %26 = vst [vmem:[#allocation2 + $0x40] sm:$0xff] 0.0
    %27 = vst [vmem:[#allocation2 + $0x48] sm:$0xff] 0.0
    %28 = vst [vmem:[#allocation2 + $0x50] sm:$0xff] 0.0
    %29 = vst [vmem:[#allocation2 + $0x58] sm:$0xff] 0.0
    %30 = vst [vmem:[#allocation2 + $0x60] sm:$0xff] 0.0
    %31 = vst [vmem:[#allocation2 + $0x68] sm:$0xff] 0.0
    %32 = vst [vmem:[#allocation2 + $0x70] sm:$0xff] 0.0
    %33 = vst [vmem:[#allocation2 + $0x78] sm:$0xff] 0.0
  $region17: #{graph_convolution.1} parent=0 // pred_fallthru
    _
  %s34 = smul.u32 0, 128
  %s35 = scalar_lea.vmem %s1, %s34
  %v36 = vld [vmem:[%s35] sm:$0xff]
  %v37 = vld [vmem:[%s35 + $0x8] sm:$0xff]
  %v38 = vld [vmem:[%s35 + $0x10] sm:$0xff]
  %v39 = vld [vmem:[%s35 + $0x18] sm:$0xff]
  %v40 = vld [vmem:[%s35 + $0x20] sm:$0xff]
  %v41 = vld [vmem:[%s35 + $0x28] sm:$0xff]
  %v42 = vld [vmem:[%s35 + $0x30] sm:$0xff]
  %v43 = vld [vmem:[%s35 + $0x38] sm:$0xff]
  %v44 = vld [vmem:[%s35 + $0x40] sm:$0xff]
  %v45 = vld [vmem:[%s35 + $0x48] sm:$0xff]
  %v46 = vld [vmem:[%s35 + $0x50] sm:$0xff]
  %v47 = vld [vmem:[%s35 + $0x58] sm:$0xff]
  %v48 = vld [vmem:[%s35 + $0x60] sm:$0xff]
  %v49 = vld [vmem:[%s35 + $0x68] sm:$0xff]
  %v50 = vld [vmem:[%s35 + $0x70] sm:$0xff]
  %v51 = vld [vmem:[%s35 + $0x78] sm:$0xff]
  %v52 = vld [vmem:[#allocation2] sm:$0xff]
  %v53 = vld [vmem:[#allocation2 + $0x8] sm:$0xff]
  %v54 = vld [vmem:[#allocation2 + $0x10] sm:$0xff]
  %v55 = vld [vmem:[#allocation2 + $0x18] sm:$0xff]
  %v56 = vld [vmem:[#allocation2 + $0x20] sm:$0xff]
  %v57 = vld [vmem:[#allocation2 + $0x28] sm:$0xff]
  %v58 = vld [vmem:[#allocation2 + $0x30] sm:$0xff]
  %v59 = vld [vmem:[#allocation2 + $0x38] sm:$0xff]
  %v60 = vld [vmem:[#allocation2 + $0x40] sm:$0xff]
  %v61 = vld [vmem:[#allocation2 + $0x48] sm:$0xff]
  %v62 = vld [vmem:[#allocation2 + $0x50] sm:$0xff]
  %v63 = vld [vmem:[#allocation2 + $0x58] sm:$0xff]
  %v64 = vld [vmem:[#allocation2 + $0x60] sm:$0xff]
  %v65 = vld [vmem:[#allocation2 + $0x68] sm:$0xff]
  %v66 = vld [vmem:[#allocation2 + $0x70] sm:$0xff]
  %v67 = vld [vmem:[#allocation2 + $0x78] sm:$0xff]
  %v68 = vld [vmem:[%s0] sm:$0xff]
  %v69 = vld [vmem:[%s0 + $0x8] sm:$0xff]
  %v70 = vld [vmem:[%s0 + $0x10] sm:$0xff]
  %v71 = vld [vmem:[%s0 + $0x18] sm:$0xff]
  %v72 = vld [vmem:[%s0 + $0x20] sm:$0xff]
  %v73 = vld [vmem:[%s0 + $0x28] sm:$0xff]
  %v74 = vld [vmem:[%s0 + $0x30] sm:$0xff]
  %v75 = vld [vmem:[%s0 + $0x38] sm:$0xff]
  %v76 = vld [vmem:[%s0 + $0x40] sm:$0xff]
  %v77 = vld [vmem:[%s0 + $0x48] sm:$0xff]
  %v78 = vld [vmem:[%s0 + $0x50] sm:$0xff]
  %v79 = vld [vmem:[%s0 + $0x58] sm:$0xff]
  %v80 = vld [vmem:[%s0 + $0x60] sm:$0xff]
  %v81 = vld [vmem:[%s0 + $0x68] sm:$0xff]
  %v82 = vld [vmem:[%s0 + $0x70] sm:$0xff]
  %v83 = vld [vmem:[%s0 + $0x78] sm:$0xff]
  %84 = vmatpush.msra.mxu0 %v51
  %85 = vmatpush.msra.mxu0 %v50
  %86 = vmatpush.msra.mxu0 %v49
  %87 = vmatpush.msra.mxu0 %v48
  %88 = vmatpush.msra.mxu0 %v47
  %89 = vmatpush.msra.mxu0 %v46
  %90 = vmatpush.msra.mxu0 %v45
  %91 = vmatpush.msra.mxu0 %v44
  %92 = vmatpush.msra.mxu0 %v43
  %93 = vmatpush.msra.mxu0 %v42
  %94 = vmatpush.msra.mxu0 %v41
  %95 = vmatpush.msra.mxu0 %v40
  %96 = vmatpush.msra.mxu0 %v39
  %97 = vmatpush.msra.mxu0 %v38
  %98 = vmatpush.msra.mxu0 %v37
  %99 = vmatpush.msra.mxu0 %v36
  %100 = vmatmul.f32.gmra.mxu0 %v68
  %v101 = vpop.f32.mrf.mxu0
  %v102 = vadd.f32 0.0, %v101
  %103 = vmatmul.f32.gmra.mxu0 %v69
  %v104 = vpop.f32.mrf.mxu0
  %v105 = vadd.f32 0.0, %v104
  %106 = vmatmul.f32.gmra.mxu0 %v70
  %v107 = vpop.f32.mrf.mxu0
  %v108 = vadd.f32 0.0, %v107
  %109 = vmatmul.f32.gmra.mxu0 %v71
  %v110 = vpop.f32.mrf.mxu0
  %v111 = vadd.f32 0.0, %v110
  %112 = vmatmul.f32.gmra.mxu0 %v72
  %v113 = vpop.f32.mrf.mxu0
  %v114 = vadd.f32 0.0, %v113
  %115 = vmatmul.f32.gmra.mxu0 %v73
  %v116 = vpop.f32.mrf.mxu0
  %v117 = vadd.f32 0.0, %v116
  %118 = vmatmul.f32.gmra.mxu0 %v74
  %v119 = vpop.f32.mrf.mxu0
  %v120 = vadd.f32 0.0, %v119
  %121 = vmatmul.f32.gmra.mxu0 %v75
  %v122 = vpop.f32.mrf.mxu0
  %v123 = vadd.f32 0.0, %v122
  %124 = vmatmul.f32.gmra.mxu0 %v76
  %v125 = vpop.f32.mrf.mxu0
  %v126 = vadd.f32 0.0, %v125
  %127 = vmatmul.f32.gmra.mxu0 %v77
  %v128 = vpop.f32.mrf.mxu0
  %v129 = vadd.f32 0.0, %v128
  %130 = vmatmul.f32.gmra.mxu0 %v78
  %v131 = vpop.f32.mrf.mxu0
  %v132 = vadd.f32 0.0, %v131
  %133 = vmatmul.f32.gmra.mxu0 %v79
  %v134 = vpop.f32.mrf.mxu0
  %v135 = vadd.f32 0.0, %v134
  %136 = vmatmul.f32.gmra.mxu0 %v80
  %v137 = vpop.f32.mrf.mxu0
  %v138 = vadd.f32 0.0, %v137
  %139 = vmatmul.f32.gmra.mxu0 %v81
  %v140 = vpop.f32.mrf.mxu0
  %v141 = vadd.f32 0.0, %v140
  %142 = vmatmul.f32.gmra.mxu0 %v82
  %v143 = vpop.f32.mrf.mxu0
  %v144 = vadd.f32 0.0, %v143
  %145 = vmatmul.f32.gmra.mxu0 %v83
  %v146 = vpop.f32.mrf.mxu0
  %v147 = vadd.f32 0.0, %v146
  %148 = vdwg.mxu0
  %v149 = vadd.f32 %v52, %v102
  %v150 = vadd.f32 %v53, %v105
  %v151 = vadd.f32 %v54, %v108
  %v152 = vadd.f32 %v55, %v111
  %v153 = vadd.f32 %v56, %v114
  %v154 = vadd.f32 %v57, %v117
  %v155 = vadd.f32 %v58, %v120
  %v156 = vadd.f32 %v59, %v123
  %v157 = vadd.f32 %v60, %v126
  %v158 = vadd.f32 %v61, %v129
  %v159 = vadd.f32 %v62, %v132
  %v160 = vadd.f32 %v63, %v135
  %v161 = vadd.f32 %v64, %v138
  %v162 = vadd.f32 %v65, %v141
  %v163 = vadd.f32 %v66, %v144
  %v164 = vadd.f32 %v67, %v147
  %165 = vst [vmem:[#allocation2] sm:$0xff] %v149
  %166 = vst [vmem:[#allocation2 + $0x8] sm:$0xff] %v150
  %167 = vst [vmem:[#allocation2 + $0x10] sm:$0xff] %v151
  %168 = vst [vmem:[#allocation2 + $0x18] sm:$0xff] %v152
  %169 = vst [vmem:[#allocation2 + $0x20] sm:$0xff] %v153
  %170 = vst [vmem:[#allocation2 + $0x28] sm:$0xff] %v154
  %171 = vst [vmem:[#allocation2 + $0x30] sm:$0xff] %v155
  %172 = vst [vmem:[#allocation2 + $0x38] sm:$0xff] %v156
  %173 = vst [vmem:[#allocation2 + $0x40] sm:$0xff] %v157
  %174 = vst [vmem:[#allocation2 + $0x48] sm:$0xff] %v158
  %175 = vst [vmem:[#allocation2 + $0x50] sm:$0xff] %v159
  %176 = vst [vmem:[#allocation2 + $0x58] sm:$0xff] %v160
  %177 = vst [vmem:[#allocation2 + $0x60] sm:$0xff] %v161
  %178 = vst [vmem:[#allocation2 + $0x68] sm:$0xff] %v162
  %179 = vst [vmem:[#allocation2 + $0x70] sm:$0xff] %v163
  %180 = vst [vmem:[#allocation2 + $0x78] sm:$0xff] %v164
  // Predicated region
  $region18: #{graph_convolution.1} parent=0 // pred_check
    %p181 = pneg %p14
  $region19: #{graph_convolution.1} parent=0 // pred_check_branch
    %183 = sbr.rel (%p181) target = $region21
  $region20: #{graph_convolution.1} parent=0 // pred_region
    %v184 = vld [vmem:[#allocation2] sm:$0xff]
    %v185 = vld [vmem:[#allocation2 + $0x8] sm:$0xff]
    %v186 = vld [vmem:[#allocation2 + $0x10] sm:$0xff]
    %v187 = vld [vmem:[#allocation2 + $0x18] sm:$0xff]
    %v188 = vld [vmem:[#allocation2 + $0x20] sm:$0xff]
    %v189 = vld [vmem:[#allocation2 + $0x28] sm:$0xff]
    %v190 = vld [vmem:[#allocation2 + $0x30] sm:$0xff]
    %v191 = vld [vmem:[#allocation2 + $0x38] sm:$0xff]
    %v192 = vld [vmem:[#allocation2 + $0x40] sm:$0xff]
    %v193 = vld [vmem:[#allocation2 + $0x48] sm:$0xff]
    %v194 = vld [vmem:[#allocation2 + $0x50] sm:$0xff]
    %v195 = vld [vmem:[#allocation2 + $0x58] sm:$0xff]
    %v196 = vld [vmem:[#allocation2 + $0x60] sm:$0xff]
    %v197 = vld [vmem:[#allocation2 + $0x68] sm:$0xff]
    %v198 = vld [vmem:[#allocation2 + $0x70] sm:$0xff]
    %v199 = vld [vmem:[#allocation2 + $0x78] sm:$0xff]
    %v200 = vld [vmem:[%s2] sm:$0xff]
    %v201 = vld [vmem:[%s2 + $0x8] sm:$0xff]
    %v202 = vld [vmem:[%s2 + $0x10] sm:$0xff]
    %v203 = vld [vmem:[%s2 + $0x18] sm:$0xff]
    %v204 = vld [vmem:[%s2 + $0x20] sm:$0xff]
    %v205 = vld [vmem:[%s2 + $0x28] sm:$0xff]
    %v206 = vld [vmem:[%s2 + $0x30] sm:$0xff]
    %v207 = vld [vmem:[%s2 + $0x38] sm:$0xff]
    %v208 = vld [vmem:[%s2 + $0x40] sm:$0xff]
    %v209 = vld [vmem:[%s2 + $0x48] sm:$0xff]
    %v210 = vld [vmem:[%s2 + $0x50] sm:$0xff]
    %v211 = vld [vmem:[%s2 + $0x58] sm:$0xff]
    %v212 = vld [vmem:[%s2 + $0x60] sm:$0xff]
    %v213 = vld [vmem:[%s2 + $0x68] sm:$0xff]
    %v214 = vld [vmem:[%s2 + $0x70] sm:$0xff]
    %v215 = vld [vmem:[%s2 + $0x78] sm:$0xff]
    %216 = vmatpush.msra.mxu0 %v215
    %217 = vmatpush.msra.mxu0 %v214
    %218 = vmatpush.msra.mxu0 %v213
    %219 = vmatpush.msra.mxu0 %v212
    %220 = vmatpush.msra.mxu0 %v211
    %221 = vmatpush.msra.mxu0 %v210
    %222 = vmatpush.msra.mxu0 %v209
    %223 = vmatpush.msra.mxu0 %v208
    %224 = vmatpush.msra.mxu0 %v207
    %225 = vmatpush.msra.mxu0 %v206
    %226 = vmatpush.msra.mxu0 %v205
    %227 = vmatpush.msra.mxu0 %v204
    %228 = vmatpush.msra.mxu0 %v203
    %229 = vmatpush.msra.mxu0 %v202
    %230 = vmatpush.msra.mxu0 %v201
    %231 = vmatpush.msra.mxu0 %v200
    %232 = vmatmul.f32.gmra.mxu0 %v184
    %v233 = vpop.f32.mrf.mxu0
    %v234 = vadd.f32 0.0, %v233
    %235 = vmatmul.f32.gmra.mxu0 %v185
    %v236 = vpop.f32.mrf.mxu0
    %v237 = vadd.f32 0.0, %v236
    %238 = vmatmul.f32.gmra.mxu0 %v186
    %v239 = vpop.f32.mrf.mxu0
    %v240 = vadd.f32 0.0, %v239
    %241 = vmatmul.f32.gmra.mxu0 %v187
    %v242 = vpop.f32.mrf.mxu0
    %v243 = vadd.f32 0.0, %v242
    %244 = vmatmul.f32.gmra.mxu0 %v188
    %v245 = vpop.f32.mrf.mxu0
    %v246 = vadd.f32 0.0, %v245
    %247 = vmatmul.f32.gmra.mxu0 %v189
    %v248 = vpop.f32.mrf.mxu0
    %v249 = vadd.f32 0.0, %v248
    %250 = vmatmul.f32.gmra.mxu0 %v190
    %v251 = vpop.f32.mrf.mxu0
    %v252 = vadd.f32 0.0, %v251
    %253 = vmatmul.f32.gmra.mxu0 %v191
    %v254 = vpop.f32.mrf.mxu0
    %v255 = vadd.f32 0.0, %v254
    %256 = vmatmul.f32.gmra.mxu0 %v192
    %v257 = vpop.f32.mrf.mxu0
    %v258 = vadd.f32 0.0, %v257
    %259 = vmatmul.f32.gmra.mxu0 %v193
    %v260 = vpop.f32.mrf.mxu0
    %v261 = vadd.f32 0.0, %v260
    %262 = vmatmul.f32.gmra.mxu0 %v194
    %v263 = vpop.f32.mrf.mxu0
    %v264 = vadd.f32 0.0, %v263
    %265 = vmatmul.f32.gmra.mxu0 %v195
    %v266 = vpop.f32.mrf.mxu0
    %v267 = vadd.f32 0.0, %v266
    %268 = vmatmul.f32.gmra.mxu0 %v196
    %v269 = vpop.f32.mrf.mxu0
    %v270 = vadd.f32 0.0, %v269
    %271 = vmatmul.f32.gmra.mxu0 %v197
    %v272 = vpop.f32.mrf.mxu0
    %v273 = vadd.f32 0.0, %v272
    %274 = vmatmul.f32.gmra.mxu0 %v198
    %v275 = vpop.f32.mrf.mxu0
    %v276 = vadd.f32 0.0, %v275
    %277 = vmatmul.f32.gmra.mxu0 %v199
    %v278 = vpop.f32.mrf.mxu0
    %v279 = vadd.f32 0.0, %v278
    %280 = vdwg.mxu0
    %281 = vst [vmem:[%s3] sm:$0xff] %v234
    %282 = vst [vmem:[%s3 + $0x8] sm:$0xff] %v237
    %283 = vst [vmem:[%s3 + $0x10] sm:$0xff] %v240
    %284 = vst [vmem:[%s3 + $0x18] sm:$0xff] %v243
    %285 = vst [vmem:[%s3 + $0x20] sm:$0xff] %v246
    %286 = vst [vmem:[%s3 + $0x28] sm:$0xff] %v249
    %287 = vst [vmem:[%s3 + $0x30] sm:$0xff] %v252
    %288 = vst [vmem:[%s3 + $0x38] sm:$0xff] %v255
    %289 = vst [vmem:[%s3 + $0x40] sm:$0xff] %v258
    %290 = vst [vmem:[%s3 + $0x48] sm:$0xff] %v261
    %291 = vst [vmem:[%s3 + $0x50] sm:$0xff] %v264
    %292 = vst [vmem:[%s3 + $0x58] sm:$0xff] %v267
    %293 = vst [vmem:[%s3 + $0x60] sm:$0xff] %v270
    %294 = vst [vmem:[%s3 + $0x68] sm:$0xff] %v273
    %295 = vst [vmem:[%s3 + $0x70] sm:$0xff] %v276
    %296 = vst [vmem:[%s3 + $0x78] sm:$0xff] %v279
  $region21: #{graph_convolution.1} parent=0 // pred_fallthru
    _
  // Predicated region
  $region22: #{graph_convolution.1} parent=0 // pred_check
    _
  $region23: #{graph_convolution.1} parent=0 // pred_check_branch
    %298 = sbr.rel (0) target = $region25
  $region24: #{graph_convolution.1} parent=0 // pred_region
    _
  $region25: #{graph_convolution.1} parent=0 // pred_fallthru
    _
  // Predicated region
  $region26: #{graph_convolution.1} parent=0 // pred_check
    _
  $region27: #{graph_convolution.1} parent=0 // pred_check_branch
    %300 = sbr.rel (0) target = $region29
  $region28: #{graph_convolution.1} parent=0 // pred_region
    _
  $region29: #{graph_convolution.1} parent=0 // pred_fallthru
    _

</llo_original>
